<compile_context>
chip_gen: v7x
topology: tpu7x:2x2x1
jax: 0.10.0
libtpu: 0.0.40
codegen_flags: <defaults>
</compile_context>

<pallas_src>
import jax
import jax.numpy as jnp
from jax.experimental import pallas as pl
from jax.experimental.pallas import tpu as pltpu


def _make_fused_kernel(obs_dim, act_dim, h1, h2):
    """Builds the fused double-Q kernel with static slab offsets baked in.

    Slab row layout (width = max(2*h1, 2*h2, 2)):
      [0, in_dim)          W1 fused (output-concat of both critics)
      in_dim               b1 fused
      [r_w2, r_w2 + 2*h1)  W2 fused (block-diagonal)
      r_b2                 b2 fused
      [r_w3, r_w3 + 2*h2)  W3 fused (block-diagonal -> 2 output cols)
      r_b3                 b3 fused
    """
    in_dim = obs_dim + act_dim
    H1, H2 = 2 * h1, 2 * h2

    r_b1 = in_dim
    r_w2 = r_b1 + 1
    r_b2 = r_w2 + H1
    r_w3 = r_b2 + 1
    r_b3 = r_w3 + H2
    n_rows = r_b3 + 1
    width = max(H1, H2, 2)

    def kernel(obs_ref, act_ref, p_ref, out_ref):
        p = p_ref[...]  # (n_rows, width) f32 parameter slab — one DMA for all params.

        w1_obs = p[0:obs_dim, :H1]
        w1_act = p[obs_dim:r_b1, :H1]
        b1 = p[r_b1, :H1]
        w2 = p[r_w2:r_b2, :H2]
        b2 = p[r_b2, :H2]
        w3 = p[r_w3:r_b3, :2]
        b3 = p[r_b3, :2]

        # Layer 1: split matmul replaces the (HBM round-trip) concat([obs, act]).
        h = (
            jnp.dot(obs_ref[...], w1_obs, preferred_element_type=jnp.float32)
            + jnp.dot(act_ref[...], w1_act, preferred_element_type=jnp.float32)
            + b1[None, :]
        )
        h = jnp.maximum(h, 0.0)  # ReLU (VPU)

        # Layer 2 (block-diagonal => both critics at once).
        h = jnp.dot(h, w2, preferred_element_type=jnp.float32) + b2[None, :]
        h = jnp.maximum(h, 0.0)

        # Layer 3: (B, 2) — column 0 is q1, column 1 is q2. Single output store.
        out_ref[...] = jnp.dot(h, w3, preferred_element_type=jnp.float32) + b3[None, :]

    return kernel, n_rows, width


def _pack_params(params1, params2, obs_dim, act_dim):
    """Packs both critics' (W, b) lists into one contiguous f32 slab.

    In a real training loop this is done once (or folded into the optimizer
    state), not per forward call.
    """
    w1a, b1a, w2a, b2a, w3a, b3a = params1
    w1b, b1b, w2b, b2b, w3b, b3b = params2
    in_dim = obs_dim + act_dim
    h1 = w1a.shape[1]
    h2 = w2a.shape[1]
    H1, H2 = 2 * h1, 2 * h2
    width = max(H1, H2, 2)

    r_b1 = in_dim
    r_w2 = r_b1 + 1
    r_b2 = r_w2 + H1
    r_w3 = r_b2 + 1
    r_b3 = r_w3 + H2
    n_rows = r_b3 + 1

    slab = jnp.zeros((n_rows, width), jnp.float32)
    # Layer 1: concat along the output axis.
    slab = slab.at[0:in_dim, 0:h1].set(w1a.astype(jnp.float32))
    slab = slab.at[0:in_dim, h1:H1].set(w1b.astype(jnp.float32))
    slab = slab.at[r_b1, 0:h1].set(b1a.reshape(-1).astype(jnp.float32))
    slab = slab.at[r_b1, h1:H1].set(b1b.reshape(-1).astype(jnp.float32))
    # Layer 2: block-diagonal.
    slab = slab.at[r_w2:r_w2 + h1, 0:h2].set(w2a.astype(jnp.float32))
    slab = slab.at[r_w2 + h1:r_b2, h2:H2].set(w2b.astype(jnp.float32))
    slab = slab.at[r_b2, 0:h2].set(b2a.reshape(-1).astype(jnp.float32))
    slab = slab.at[r_b2, h2:H2].set(b2b.reshape(-1).astype(jnp.float32))
    # Layer 3: block-diagonal into 2 output columns.
    slab = slab.at[r_w3:r_w3 + h2, 0:1].set(w3a.astype(jnp.float32))
    slab = slab.at[r_w3 + h2:r_b3, 1:2].set(w3b.astype(jnp.float32))
    slab = slab.at[r_b3, 0].set(b3a.reshape(-1)[0].astype(jnp.float32))
    slab = slab.at[r_b3, 1].set(b3b.reshape(-1)[0].astype(jnp.float32))
    return slab, h1, h2


def actor_critic_forward(obs, act, params1, params2):
    """Returns (q1, q2), each of shape (B,) — matches torch .squeeze(-1)."""
    obs = obs.astype(jnp.float32)
    act = act.astype(jnp.float32)
    obs_dim = obs.shape[-1]
    act_dim = act.shape[-1]
    B = obs.shape[0]

    slab, h1, h2 = _pack_params(params1, params2, obs_dim, act_dim)
    kernel, _, _ = _make_fused_kernel(obs_dim, act_dim, h1, h2)

    vmem = pl.BlockSpec(memory_space=pltpu.MemorySpace.VMEM)
    out = pl.pallas_call(
        kernel,
        out_shape=jax.ShapeDtypeStruct((B, 2), jnp.float32),
        in_specs=[vmem, vmem, vmem],
        out_specs=vmem,
    )(obs, act, slab)

    return out[:, 0], out[:, 1]


def _init_mlp_params(key, sizes):
    """Deterministic MLP init: list of (W, b) with W shape (in, out), b shape (out,)."""
    params = []
    for i in range(len(sizes) - 1):
        key, kw, kb = jax.random.split(key, 3)
        fan_in, fan_out = sizes[i], sizes[i + 1]
        bound = 1.0 / jnp.sqrt(jnp.float32(fan_in))
        w = jax.random.uniform(kw, (fan_in, fan_out), jnp.float32, -bound, bound)
        b = jax.random.uniform(kb, (fan_out,), jnp.float32, -bound, bound)
        params.extend([w, b])
    return params, key


def _reference_q(x, params):
    w1, b1, w2, b2, w3, b3 = params
    h = jnp.maximum(x @ w1 + b1[None, :], 0.0)
    h = jnp.maximum(h @ w2 + b2[None, :], 0.0)
    return (h @ w3 + b3[None, :])[:, 0]


if __name__ == "__main__":
    # Small shapes consistent with the module.
    B = 8
    obs_dim = 12
    act_dim = 4
    hidden_sizes = (32, 32)
    sizes = [obs_dim + act_dim, hidden_sizes[0], hidden_sizes[1], 1]

    key = jax.random.PRNGKey(0)
    key, k_obs, k_act = jax.random.split(key, 3)
    obs = jax.random.normal(k_obs, (B, obs_dim), jnp.float32)
    act = jax.random.normal(k_act, (B, act_dim), jnp.float32)

    params1, key = _init_mlp_params(key, sizes)
    params2, key = _init_mlp_params(key, sizes)

    q1, q2 = actor_critic_forward(obs, act, params1, params2)
    q1 = jax.block_until_ready(q1)
    q2 = jax.block_until_ready(q2)

    # Correctness check vs. plain-JAX reference of the same math.
    x = jnp.concatenate([obs, act], axis=-1)
    q1_ref = _reference_q(x, params1)
    q2_ref = _reference_q(x, params2)
    assert q1.shape == (B,) and q2.shape == (B,)
    assert jnp.allclose(q1, q1_ref, atol=1e-4, rtol=1e-4), "q1 mismatch"
    assert jnp.allclose(q2, q2_ref, atol=1e-4, rtol=1e-4), "q2 mismatch"

    # TODO(synk): the stochastic policy path (SquashedGaussianPolicy sampling in
    # ActorCritic.act) is not part of forward() and is not implemented here.

    print("KERNEL_OK")
</pallas_src>

<mosaic_0001>
module attributes {stable_mosaic.version = 11 : i64} {
  func.func @kernel(%arg0: memref<8x12xf32, #tpu.memory_space<vmem>>, %arg1: memref<8x4xf32, #tpu.memory_space<vmem>>, %arg2: memref<147x64xf32, #tpu.memory_space<vmem>>, %arg3: memref<8x2xf32, #tpu.memory_space<vmem>>) attributes {dimension_semantics = [], scalar_prefetch = 0 : i64, scratch_operands = 0 : i64, tpu.core_type = #tpu.core_type<tc>} {
    %c0 = arith.constant 0 : index
    %c0_0 = arith.constant 0 : index
    %0 = vector.load %arg2[%c0, %c0_0] : memref<147x64xf32, #tpu.memory_space<vmem>>, vector<147x64xf32>
    %1 = vector.extract_strided_slice %0 {offsets = [0, 0], sizes = [12, 64], strides = [1, 1]} : vector<147x64xf32> to vector<12x64xf32>
    %2 = vector.extract_strided_slice %0 {offsets = [12, 0], sizes = [4, 64], strides = [1, 1]} : vector<147x64xf32> to vector<4x64xf32>
    %3 = vector.extract_strided_slice %0 {offsets = [16, 0], sizes = [1, 64], strides = [1, 1]} : vector<147x64xf32> to vector<1x64xf32>
    %4 = vector.shape_cast %3 : vector<1x64xf32> to vector<64xf32>
    %5 = vector.extract_strided_slice %0 {offsets = [17, 0], sizes = [64, 64], strides = [1, 1]} : vector<147x64xf32> to vector<64x64xf32>
    %6 = vector.extract_strided_slice %0 {offsets = [81, 0], sizes = [1, 64], strides = [1, 1]} : vector<147x64xf32> to vector<1x64xf32>
    %7 = vector.shape_cast %6 : vector<1x64xf32> to vector<64xf32>
    %8 = vector.extract_strided_slice %0 {offsets = [82, 0], sizes = [64, 2], strides = [1, 1]} : vector<147x64xf32> to vector<64x2xf32>
    %9 = vector.extract_strided_slice %0 {offsets = [146, 0], sizes = [1, 2], strides = [1, 1]} : vector<147x64xf32> to vector<1x2xf32>
    %10 = vector.shape_cast %9 : vector<1x2xf32> to vector<2xf32>
    %c0_1 = arith.constant 0 : index
    %c0_2 = arith.constant 0 : index
    %11 = vector.load %arg0[%c0_1, %c0_2] : memref<8x12xf32, #tpu.memory_space<vmem>>, vector<8x12xf32>
    %cst = arith.constant dense<0.000000e+00> : vector<8x64xf32>
    %12 = tpu.matmul %11, %1, %cst {dimension_numbers = #tpu.dot_dimension_numbers<[1], [0], [0], [1], [0, 0, 1, 1], [], []>} : vector<8x12xf32>, vector<12x64xf32>, vector<8x64xf32> -> vector<8x64xf32>
    %c0_3 = arith.constant 0 : index
    %c0_4 = arith.constant 0 : index
    %13 = vector.load %arg1[%c0_3, %c0_4] : memref<8x4xf32, #tpu.memory_space<vmem>>, vector<8x4xf32>
    %cst_5 = arith.constant dense<0.000000e+00> : vector<8x64xf32>
    %14 = tpu.matmul %13, %2, %cst_5 {dimension_numbers = #tpu.dot_dimension_numbers<[1], [0], [0], [1], [0, 0, 1, 1], [], []>} : vector<8x4xf32>, vector<4x64xf32>, vector<8x64xf32> -> vector<8x64xf32>
    %15 = arith.addf %12, %14 : vector<8x64xf32>
    %16 = vector.shape_cast %4 : vector<64xf32> to vector<1x64xf32>
    %17 = vector.broadcast %16 : vector<1x64xf32> to vector<8x64xf32>
    %18 = arith.addf %15, %17 : vector<8x64xf32>
    %cst_6 = arith.constant 0.000000e+00 : f32
    %19 = vector.broadcast %cst_6 : f32 to vector<8x64xf32>
    %20 = arith.maximumf %18, %19 : vector<8x64xf32>
    %cst_7 = arith.constant dense<0.000000e+00> : vector<8x64xf32>
    %21 = tpu.matmul %20, %5, %cst_7 {dimension_numbers = #tpu.dot_dimension_numbers<[1], [0], [0], [1], [0, 0, 1, 1], [], []>} : vector<8x64xf32>, vector<64x64xf32>, vector<8x64xf32> -> vector<8x64xf32>
    %22 = vector.shape_cast %7 : vector<64xf32> to vector<1x64xf32>
    %23 = vector.broadcast %22 : vector<1x64xf32> to vector<8x64xf32>
    %24 = arith.addf %21, %23 : vector<8x64xf32>
    %cst_8 = arith.constant 0.000000e+00 : f32
    %25 = vector.broadcast %cst_8 : f32 to vector<8x64xf32>
    %26 = arith.maximumf %24, %25 : vector<8x64xf32>
    %cst_9 = arith.constant dense<0.000000e+00> : vector<8x2xf32>
    %27 = tpu.matmul %26, %8, %cst_9 {dimension_numbers = #tpu.dot_dimension_numbers<[1], [0], [0], [1], [0, 0, 1, 1], [], []>} : vector<8x64xf32>, vector<64x2xf32>, vector<8x2xf32> -> vector<8x2xf32>
    %28 = vector.shape_cast %10 : vector<2xf32> to vector<1x2xf32>
    %29 = vector.broadcast %28 : vector<1x2xf32> to vector<8x2xf32>
    %30 = arith.addf %27, %29 : vector<8x2xf32>
    %c0_10 = arith.constant 0 : index
    %c0_11 = arith.constant 0 : index
    %31 = vector.load %arg3[%c0_10, %c0_11] : memref<8x2xf32, #tpu.memory_space<vmem>>, vector<8x2xf32>
    tpu.vector_store %arg3[%c0_10, %c0_11], %30 {strides = array<i32>} : memref<8x2xf32, #tpu.memory_space<vmem>>, vector<8x2xf32>,
    return
  }
}

</mosaic_0001>

<llo_original>
// kernel: tpu_custom_call.1
$region0: #{tpu_custom_call.1}
  #allocation0 [shape = 'u32[]', space=smem, size = 0x4, offset = 0x4, fixed_abs, tag = 'smem constant byte address 0x4 - core index']
  #allocation1 [shape = 'u32[144,128]{1,0:T(1,128)}', space=vmem, size = 0x12000, scoped, tag = 'internal scratch']
  %s0 = inlined_call_operand.vmem [shape: f32[8,12], index: 0, kind: input, shape index: {}]
  %s1 = inlined_call_operand.vmem [shape: f32[8,4], index: 1, kind: input, shape index: {}]
  %s2 = inlined_call_operand.vmem [shape: f32[147,64], index: 2, kind: input, shape index: {}]
  %s3 = inlined_call_operand.vmem [shape: f32[8,2], index: 3, kind: output, shape index: {}]
  %s4 = sld [smem:[#allocation0]]
  $region22: #{tpu_custom_call.1} parent=0
    _
  %s6 = ssub.s32 1, %s4
  %s7 = scalar_select 0, %s6, %s4
  // Predicated region
  $region2: #{tpu_custom_call.1} parent=0 // pred_check
    _
  $region3: #{tpu_custom_call.1} parent=0 // pred_check_branch
    %9 = sbr.rel (0) target = $region5
  $region4: #{tpu_custom_call.1} parent=0 // pred_region
    _
  $region5: #{tpu_custom_call.1} parent=0 // pred_fallthru
    _
  // Predicated region
  $region6: #{tpu_custom_call.1} parent=0 // pred_check
    _
  $region7: #{tpu_custom_call.1} parent=0 // pred_check_branch
    %11 = sbr.rel (0) target = $region9
  $region8: #{tpu_custom_call.1} parent=0 // pred_region
    _
  $region9: #{tpu_custom_call.1} parent=0 // pred_fallthru
    _
  // Predicated region
  $region10: #{tpu_custom_call.1} parent=0 // pred_check
    _
  $region11: #{tpu_custom_call.1} parent=0 // pred_check_branch
    %13 = sbr.rel (0) target = $region13
  $region12: #{tpu_custom_call.1} parent=0 // pred_region
    _
  $region13: #{tpu_custom_call.1} parent=0 // pred_fallthru
    _
  %v14 = vld [vmem:[%s2] sm:$0xff]
  %v15 = vld [vmem:[%s2 + $0x8] sm:$0xff]
  %v16 = vld [vmem:[%s2 + $0x10] sm:$0xff]
  %v17 = vld [vmem:[%s2 + $0x18] sm:$0xff]
  %v18 = vld [vmem:[%s2 + $0x20] sm:$0xff]
  %v19 = vld [vmem:[%s2 + $0x28] sm:$0xff]
  %v20 = vld [vmem:[%s2 + $0x30] sm:$0xff]
  %v21 = vld [vmem:[%s2 + $0x38] sm:$0xff]
  %v22 = vld [vmem:[%s2 + $0x40] sm:$0xff]
  %v23 = vld [vmem:[%s2 + $0x48] sm:$0xff]
  %v24 = vld [vmem:[%s2 + $0x50] sm:$0xff]
  %v25 = vld [vmem:[%s2 + $0x58] sm:$0xff]
  %v26 = vld [vmem:[%s2 + $0x60] sm:$0xff]
  %v27 = vld [vmem:[%s2 + $0x68] sm:$0xff]
  %v28 = vld [vmem:[%s2 + $0x70] sm:$0xff]
  %v29 = vld [vmem:[%s2 + $0x78] sm:$0xff]
  %v30 = vld [vmem:[%s2 + $0x80] sm:$0xff]
  %v31 = vld [vmem:[%s2 + $0x88] sm:$0xff]
  %v32 = vld [vmem:[%s2 + $0x90] sm:$0x7]
  %v33 = vld [vmem:[%s0] sm:$0xff]
  %v34 = vld [vmem:[%s1] sm:$0xff]
  %v36 = vrot.slane %v15, 4
  %vm37 = vcmask 31744
  %v39 = vsel %vm37, %v34, 0
  %vm41 = vcmask 1043456
  %v42 = vsel %vm41, %v36, 0
  %44 = vmatprep.subr.mxu0 0.0
  %45 = vmatpush1.msra.mxu0 %v42
  %46 = vmatprep.subr.mxu0 0.0
  %47 = vmatpush1.msra.mxu0 0.0
  %48 = vmatprep.subr.mxu0 0.0
  %49 = vmatpush1.msra.mxu0 0.0
  %50 = vmatprep.subr.mxu0 0.0
  %51 = vmatpush1.msra.mxu0 0.0
  %52 = vmatprep.subr.mxu0 0.0
  %53 = vmatpush1.msra.mxu0 0.0
  %54 = vmatprep.subr.mxu0 0.0
  %55 = vmatpush1.msra.mxu0 0.0
  %56 = vmatprep.subr.mxu0 0.0
  %57 = vmatpush1.msra.mxu0 0.0
  %58 = vmatprep.subr.mxu0 0.0
  %59 = vmatpush1.msra.mxu0 0.0
  %60 = vmatprep.subr.mxu0 0.0
  %61 = vmatpush1.msra.mxu0 0.0
  %62 = vmatprep.subr.mxu0 0.0
  %63 = vmatpush1.msra.mxu0 0.0
  %64 = vmatprep.subr.mxu0 0.0
  %65 = vmatpush1.msra.mxu0 0.0
  %66 = vmatprep.subr.mxu0 0.0
  %67 = vmatpush1.msra.mxu0 0.0
  %68 = vmatprep.subr.mxu0 0.0
  %69 = vmatpush1.msra.mxu0 0.0
  %70 = vmatprep.subr.mxu0 0.0
  %71 = vmatpush1.msra.mxu0 0.0
  %72 = vmatprep.subr.mxu0 0.0
  %73 = vmatpush1.msra.mxu0 0.0
  %74 = vmatprep.subr.mxu0 0.0
  %75 = vmatpush1.msra.mxu0 0.0
  %76 = vmatprep.subr.mxu0 0.0
  %77 = vmatpush1.msra.mxu0 0.0
  %78 = vmatprep.subr.mxu0 0.0
  %79 = vmatpush1.msra.mxu0 0.0
  %80 = vmatprep.subr.mxu0 0.0
  %81 = vmatpush1.msra.mxu0 0.0
  %82 = vmatprep.subr.mxu0 0.0
  %83 = vmatpush1.msra.mxu0 0.0
  %84 = vmatprep.subr.mxu0 0.0
  %85 = vmatpush1.msra.mxu0 0.0
  %86 = vmatprep.subr.mxu0 0.0
  %87 = vmatpush1.msra.mxu0 0.0
  %88 = vmatprep.subr.mxu0 0.0
  %89 = vmatpush1.msra.mxu0 0.0
  %90 = vmatprep.subr.mxu0 0.0
  %91 = vmatpush1.msra.mxu0 0.0
  %92 = vmatprep.subr.mxu0 0.0
  %93 = vmatpush1.msra.mxu0 0.0
  %94 = vmatprep.subr.mxu0 0.0
  %95 = vmatpush1.msra.mxu0 0.0
  %96 = vmatprep.subr.mxu0 0.0
  %97 = vmatpush1.msra.mxu0 0.0
  %98 = vmatprep.subr.mxu0 0.0
  %99 = vmatpush1.msra.mxu0 0.0
  %100 = vmatprep.subr.mxu0 0.0
  %101 = vmatpush1.msra.mxu0 0.0
  %102 = vmatprep.subr.mxu0 0.0
  %103 = vmatpush1.msra.mxu0 0.0
  %104 = vmatprep.subr.mxu0 0.0
  %105 = vmatpush1.msra.mxu0 0.0
  %106 = vmatprep.subr.mxu0 0.0
  %107 = vmatpush1.msra.mxu0 0.0
  %108 = vmatprep.mubr.f32.mxu0 0.0
  %109 = vmatmul.mubr.f32.gmra.mrb[0].mxu0 %v39
  %v110 = vpop.f32.mrb[0].mxu0
  %v111 = vadd.f32 0.0, %v110
  %v112 = vpop.f32.mrb[0].mxu0
  %113 = vdwg.mxu0
  %vm114 = vcmask 97280
  %v116 = vsel %vm114, %v33, 0
  %v118 = vsel %vm41, %v15, 0
  %120 = vmatprep.subr.mxu0 0.0
  %121 = vmatpush1.msra.mxu0 %v14
  %122 = vmatprep.subr.mxu0 0.0
  %123 = vmatpush1.msra.mxu0 %v118
  %124 = vmatprep.subr.mxu0 0.0
  %125 = vmatpush1.msra.mxu0 0.0
  %126 = vmatprep.subr.mxu0 0.0
  %127 = vmatpush1.msra.mxu0 0.0
  %128 = vmatprep.subr.mxu0 0.0
  %129 = vmatpush1.msra.mxu0 0.0
  %130 = vmatprep.subr.mxu0 0.0
  %131 = vmatpush1.msra.mxu0 0.0
  %132 = vmatprep.subr.mxu0 0.0
  %133 = vmatpush1.msra.mxu0 0.0
  %134 = vmatprep.subr.mxu0 0.0
  %135 = vmatpush1.msra.mxu0 0.0
  %136 = vmatprep.subr.mxu0 0.0
  %137 = vmatpush1.msra.mxu0 0.0
  %138 = vmatprep.subr.mxu0 0.0
  %139 = vmatpush1.msra.mxu0 0.0
  %140 = vmatprep.subr.mxu0 0.0
  %141 = vmatpush1.msra.mxu0 0.0
  %142 = vmatprep.subr.mxu0 0.0
  %143 = vmatpush1.msra.mxu0 0.0
  %144 = vmatprep.subr.mxu0 0.0
  %145 = vmatpush1.msra.mxu0 0.0
  %146 = vmatprep.subr.mxu0 0.0
  %147 = vmatpush1.msra.mxu0 0.0
  %148 = vmatprep.subr.mxu0 0.0
  %149 = vmatpush1.msra.mxu0 0.0
  %150 = vmatprep.subr.mxu0 0.0
  %151 = vmatpush1.msra.mxu0 0.0
  %152 = vmatprep.subr.mxu0 0.0
  %153 = vmatpush1.msra.mxu0 0.0
  %154 = vmatprep.subr.mxu0 0.0
  %155 = vmatpush1.msra.mxu0 0.0
  %156 = vmatprep.subr.mxu0 0.0
  %157 = vmatpush1.msra.mxu0 0.0
  %158 = vmatprep.subr.mxu0 0.0
  %159 = vmatpush1.msra.mxu0 0.0
  %160 = vmatprep.subr.mxu0 0.0
  %161 = vmatpush1.msra.mxu0 0.0
  %162 = vmatprep.subr.mxu0 0.0
  %163 = vmatpush1.msra.mxu0 0.0
  %164 = vmatprep.subr.mxu0 0.0
  %165 = vmatpush1.msra.mxu0 0.0
  %166 = vmatprep.subr.mxu0 0.0
  %167 = vmatpush1.msra.mxu0 0.0
  %168 = vmatprep.subr.mxu0 0.0
  %169 = vmatpush1.msra.mxu0 0.0
  %170 = vmatprep.subr.mxu0 0.0
  %171 = vmatpush1.msra.mxu0 0.0
  %172 = vmatprep.subr.mxu0 0.0
  %173 = vmatpush1.msra.mxu0 0.0
  %174 = vmatprep.subr.mxu0 0.0
  %175 = vmatpush1.msra.mxu0 0.0
  %176 = vmatprep.subr.mxu0 0.0
  %177 = vmatpush1.msra.mxu0 0.0
  %178 = vmatprep.subr.mxu0 0.0
  %179 = vmatpush1.msra.mxu0 0.0
  %180 = vmatprep.subr.mxu0 0.0
  %181 = vmatpush1.msra.mxu0 0.0
  %182 = vmatprep.subr.mxu0 0.0
  %183 = vmatpush1.msra.mxu0 0.0
  %184 = vmatprep.mubr.f32.mxu0 0.0
  %185 = vmatmul.mubr.f32.gmra.mrb[0].mxu0 %v116
  %v186 = vpop.f32.mrb[0].mxu0
  %v187 = vadd.f32 %v111, %v186
  %v188 = vpop.f32.mrb[0].mxu0
  %189 = vdwg.mxu0
  %v190 = vlaneseq
  %v191 = vshrl.u32 %v190, 7
  %v192 = vsub.s32 0, %v191
  %v193 = vrot.slane %v16, %v192
  %v194 = vadd.f32 %v187, %v193
  %v195 = vmax.f32 %v194, 0.0
  %v196 = vlaneseq
  %v197 = vshrl.u32 %v196, 7
  %v198 = vsub.s32 1, %v197
  %v199 = vrot.slane %v24, %v198
  %vm209 = vcmask 1046528
  %v210 = vrot.slane %v16, 1
  %v211 = vrot.slane %v17, 1
  %v212 = vsel %vm209, %v210, %v211
  %v213 = vrot.slane %v18, 1
  %v214 = vsel %vm209, %v211, %v213
  %v215 = vrot.slane %v19, 1
  %v216 = vsel %vm209, %v213, %v215
  %v217 = vrot.slane %v20, 1
  %v218 = vsel %vm209, %v215, %v217
  %v219 = vrot.slane %v21, 1
  %v220 = vsel %vm209, %v217, %v219
  %v221 = vrot.slane %v22, 1
  %v222 = vsel %vm209, %v219, %v221
  %v223 = vrot.slane %v23, 1
  %v224 = vsel %vm209, %v221, %v223
  %v225 = vrot.slane %v24, 1
  %v226 = vsel %vm209, %v223, %v225
  %vm235 = vcmask 523264
  %v237 = vsel %vm235, %v195, 0
  %239 = vmatprep.subr.mxu0 0.0
  %240 = vmatpush1.msra.mxu0 %v212
  %241 = vmatprep.subr.mxu0 0.0
  %242 = vmatpush1.msra.mxu0 %v214
  %243 = vmatprep.subr.mxu0 0.0
  %244 = vmatpush1.msra.mxu0 %v216
  %245 = vmatprep.subr.mxu0 0.0
  %246 = vmatpush1.msra.mxu0 %v218
  %247 = vmatprep.subr.mxu0 0.0
  %248 = vmatpush1.msra.mxu0 %v220
  %249 = vmatprep.subr.mxu0 0.0
  %250 = vmatpush1.msra.mxu0 %v222
  %251 = vmatprep.subr.mxu0 0.0
  %252 = vmatpush1.msra.mxu0 %v224
  %253 = vmatprep.subr.mxu0 0.0
  %254 = vmatpush1.msra.mxu0 %v226
  %255 = vmatprep.subr.mxu0 0.0
  %256 = vmatpush1.msra.mxu0 0.0
  %257 = vmatprep.subr.mxu0 0.0
  %258 = vmatpush1.msra.mxu0 0.0
  %259 = vmatprep.subr.mxu0 0.0
  %260 = vmatpush1.msra.mxu0 0.0
  %261 = vmatprep.subr.mxu0 0.0
  %262 = vmatpush1.msra.mxu0 0.0
  %263 = vmatprep.subr.mxu0 0.0
  %264 = vmatpush1.msra.mxu0 0.0
  %265 = vmatprep.subr.mxu0 0.0
  %266 = vmatpush1.msra.mxu0 0.0
  %267 = vmatprep.subr.mxu0 0.0
  %268 = vmatpush1.msra.mxu0 0.0
  %269 = vmatprep.subr.mxu0 0.0
  %270 = vmatpush1.msra.mxu0 0.0
  %271 = vmatprep.subr.mxu0 0.0
  %272 = vmatpush1.msra.mxu0 0.0
  %273 = vmatprep.subr.mxu0 0.0
  %274 = vmatpush1.msra.mxu0 0.0
  %275 = vmatprep.subr.mxu0 0.0
  %276 = vmatpush1.msra.mxu0 0.0
  %277 = vmatprep.subr.mxu0 0.0
  %278 = vmatpush1.msra.mxu0 0.0
  %279 = vmatprep.subr.mxu0 0.0
  %280 = vmatpush1.msra.mxu0 0.0
  %281 = vmatprep.subr.mxu0 0.0
  %282 = vmatpush1.msra.mxu0 0.0
  %283 = vmatprep.subr.mxu0 0.0
  %284 = vmatpush1.msra.mxu0 0.0
  %285 = vmatprep.subr.mxu0 0.0
  %286 = vmatpush1.msra.mxu0 0.0
  %287 = vmatprep.subr.mxu0 0.0
  %288 = vmatpush1.msra.mxu0 0.0
  %289 = vmatprep.subr.mxu0 0.0
  %290 = vmatpush1.msra.mxu0 0.0
  %291 = vmatprep.subr.mxu0 0.0
  %292 = vmatpush1.msra.mxu0 0.0
  %293 = vmatprep.subr.mxu0 0.0
  %294 = vmatpush1.msra.mxu0 0.0
  %295 = vmatprep.subr.mxu0 0.0
  %296 = vmatpush1.msra.mxu0 0.0
  %297 = vmatprep.subr.mxu0 0.0
  %298 = vmatpush1.msra.mxu0 0.0
  %299 = vmatprep.subr.mxu0 0.0
  %300 = vmatpush1.msra.mxu0 0.0
  %301 = vmatprep.subr.mxu0 0.0
  %302 = vmatpush1.msra.mxu0 0.0
  %303 = vmatprep.mubr.f32.mxu0 0.0
  %304 = vmatmul.mubr.f32.gmra.mrb[0].mxu0 %v237
  %v305 = vpop.f32.mrb[0].mxu0
  %v306 = vadd.f32 %v199, %v305
  %v307 = vpop.f32.mrb[0].mxu0
  %308 = vdwg.mxu0
  %v309 = vmax.f32 %v306, 0.0
  %v310 = vlaneseq
  %v311 = vshrl.u32 %v310, 7
  %v312 = vsub.s32 2, %v311
  %v313 = vrot.slane %v32, %v312
  %vm322 = vcmask 1045504
  %v323 = vrot.slane %v24, 2
  %v324 = vrot.slane %v25, 2
  %v325 = vsel %vm322, %v323, %v324
  %v326 = vrot.slane %v26, 2
  %v327 = vsel %vm322, %v324, %v326
  %v328 = vrot.slane %v27, 2
  %v329 = vsel %vm322, %v326, %v328
  %v330 = vrot.slane %v28, 2
  %v331 = vsel %vm322, %v328, %v330
  %v332 = vrot.slane %v29, 2
  %v333 = vsel %vm322, %v330, %v332
  %v334 = vrot.slane %v30, 2
  %v335 = vsel %vm322, %v332, %v334
  %v336 = vrot.slane %v31, 2
  %v337 = vsel %vm322, %v334, %v336
  %v338 = vrot.slane %v32, 2
  %v339 = vsel %vm322, %v336, %v338
  %v349 = vsel %vm235, %v309, 0
  %351 = vmatprep.subr.mxu0 0.0
  %352 = vmatpush1.msra.mxu0 %v325
  %353 = vmatprep.subr.mxu0 0.0
  %354 = vmatpush1.msra.mxu0 %v327
  %355 = vmatprep.subr.mxu0 0.0
  %356 = vmatpush1.msra.mxu0 %v329
  %357 = vmatprep.subr.mxu0 0.0
  %358 = vmatpush1.msra.mxu0 %v331
  %359 = vmatprep.subr.mxu0 0.0
  %360 = vmatpush1.msra.mxu0 %v333
  %361 = vmatprep.subr.mxu0 0.0
  %362 = vmatpush1.msra.mxu0 %v335
  %363 = vmatprep.subr.mxu0 0.0
  %364 = vmatpush1.msra.mxu0 %v337
  %365 = vmatprep.subr.mxu0 0.0
  %366 = vmatpush1.msra.mxu0 %v339
  %367 = vmatprep.subr.mxu0 0.0
  %368 = vmatpush1.msra.mxu0 0.0
  %369 = vmatprep.subr.mxu0 0.0
  %370 = vmatpush1.msra.mxu0 0.0
  %371 = vmatprep.subr.mxu0 0.0
  %372 = vmatpush1.msra.mxu0 0.0
  %373 = vmatprep.subr.mxu0 0.0
  %374 = vmatpush1.msra.mxu0 0.0
  %375 = vmatprep.subr.mxu0 0.0
  %376 = vmatpush1.msra.mxu0 0.0
  %377 = vmatprep.subr.mxu0 0.0
  %378 = vmatpush1.msra.mxu0 0.0
  %379 = vmatprep.subr.mxu0 0.0
  %380 = vmatpush1.msra.mxu0 0.0
  %381 = vmatprep.subr.mxu0 0.0
  %382 = vmatpush1.msra.mxu0 0.0
  %383 = vmatprep.subr.mxu0 0.0
  %384 = vmatpush1.msra.mxu0 0.0
  %385 = vmatprep.subr.mxu0 0.0
  %386 = vmatpush1.msra.mxu0 0.0
  %387 = vmatprep.subr.mxu0 0.0
  %388 = vmatpush1.msra.mxu0 0.0
  %389 = vmatprep.subr.mxu0 0.0
  %390 = vmatpush1.msra.mxu0 0.0
  %391 = vmatprep.subr.mxu0 0.0
  %392 = vmatpush1.msra.mxu0 0.0
  %393 = vmatprep.subr.mxu0 0.0
  %394 = vmatpush1.msra.mxu0 0.0
  %395 = vmatprep.subr.mxu0 0.0
  %396 = vmatpush1.msra.mxu0 0.0
  %397 = vmatprep.subr.mxu0 0.0
  %398 = vmatpush1.msra.mxu0 0.0
  %399 = vmatprep.subr.mxu0 0.0
  %400 = vmatpush1.msra.mxu0 0.0
  %401 = vmatprep.subr.mxu0 0.0
  %402 = vmatpush1.msra.mxu0 0.0
  %403 = vmatprep.subr.mxu0 0.0
  %404 = vmatpush1.msra.mxu0 0.0
  %405 = vmatprep.subr.mxu0 0.0
  %406 = vmatpush1.msra.mxu0 0.0
  %407 = vmatprep.subr.mxu0 0.0
  %408 = vmatpush1.msra.mxu0 0.0
  %409 = vmatprep.subr.mxu0 0.0
  %410 = vmatpush1.msra.mxu0 0.0
  %411 = vmatprep.subr.mxu0 0.0
  %412 = vmatpush1.msra.mxu0 0.0
  %413 = vmatprep.subr.mxu0 0.0
  %414 = vmatpush1.msra.mxu0 0.0
  %415 = vmatprep.mubr.f32.mxu0 0.0
  %416 = vmatmul.mubr.f32.gmra.mrb[0].mxu0 %v349
  %v417 = vpop.f32.mrb[0].mxu0
  %v418 = vadd.f32 %v313, %v417
  %v419 = vpop.f32.mrb[0].mxu0
  %420 = vdwg.mxu0
  %vm421 = vcmask 15360
  %422 = vst.msk [vmem:[%s3] sm:$0xff] %vm421, %v418
  // Predicated region
  $region14: #{tpu_custom_call.1} parent=0 // pred_check
    _
  $region15: #{tpu_custom_call.1} parent=0 // pred_check_branch
    %424 = sbr.rel (0) target = $region17
  $region16: #{tpu_custom_call.1} parent=0 // pred_region
    _
  $region17: #{tpu_custom_call.1} parent=0 // pred_fallthru
    _
  // Predicated region
  $region18: #{tpu_custom_call.1} parent=0 // pred_check
    _
  $region19: #{tpu_custom_call.1} parent=0 // pred_check_branch
    %426 = sbr.rel (0) target = $region21
  $region20: #{tpu_custom_call.1} parent=0 // pred_region
    _
  $region21: #{tpu_custom_call.1} parent=0 // pred_fallthru
    _

</llo_original>
